<compile_context>
chip_gen: v5e
topology: v5e:2x2
jax: 0.10.0
libtpu: 0.0.40
codegen_flags: <defaults>
</compile_context>

<pallas_src>
import math

import jax
import jax.numpy as jnp
from jax.experimental import pallas as pl
from jax.experimental.pallas import tpu as pltpu


def _round_up(x, m):
    return (x + m - 1) // m * m


def _pad_to(a, target_shape):
    pads = tuple((0, t - s) for s, t in zip(a.shape, target_shape))
    if all(p == (0, 0) for p in pads):
        return a  # zero-width pad: no extra HBM copy
    return jnp.pad(a, pads)


def _gcn_kernel_path_a(x_ref, adj_ref, w_ref, b_ref, o_ref, acc_ref):
    """F_in <= F_out: acc += adj_tile @ x_tile ; out = acc @ W + b."""
    k = pl.program_id(2)

    @pl.when(k == 0)
    def _():
        acc_ref[...] = jnp.zeros_like(acc_ref)

    acc_ref[...] += jnp.dot(adj_ref[...], x_ref[...],
                            preferred_element_type=jnp.float32)

    @pl.when(k == pl.num_programs(2) - 1)
    def _():
        out = jnp.dot(acc_ref[...], w_ref[...],
                      preferred_element_type=jnp.float32)
        o_ref[...] = (out + b_ref[...]).astype(o_ref.dtype)


def _gcn_kernel_path_b(s_ref, adj_ref, b_ref, o_ref, acc_ref):
    """F_out < F_in: support precomputed outside; acc += adj_tile @ s_tile."""
    k = pl.program_id(2)

    @pl.when(k == 0)
    def _():
        acc_ref[...] = jnp.zeros_like(acc_ref)

    acc_ref[...] += jnp.dot(adj_ref[...], s_ref[...],
                            preferred_element_type=jnp.float32)

    @pl.when(k == pl.num_programs(2) - 1)
    def _():
        o_ref[...] = (acc_ref[...] + b_ref[...]).astype(o_ref.dtype)


def _pick_tiles(n_p, rhs_f_p, f_out_p, acc_f_p, stream_item, weight_bytes,
                budget_bytes):
    """Largest (tm, tk), multiples of 128 dividing n_p, within VMEM budget."""
    m = n_p // 128

    def ws(tm, tk):
        return (2 * tm * tk * stream_item            # adj tile, double-buffered
                + 2 * tk * rhs_f_p * stream_item     # x / support K-tile
                + 2 * tm * f_out_p * 4               # output tile (f32)
                + tm * acc_f_p * 4                   # f32 accumulator scratch
                + 2 * weight_bytes                   # resident weight (path A)
                + 2 * f_out_p * 4)                   # bias

    tm_cands = [d * 128 for d in range(min(m, 4), 0, -1) if m % d == 0]
    tk_cands = [d * 128 for d in range(min(m, 8), 0, -1) if m % d == 0]
    best = None
    for tm in tm_cands:
        for tk in tk_cands:
            if ws(tm, tk) <= budget_bytes:
                key = (tm * tk, tm)
                if best is None or key > best[0]:
                    best = (key, tm, tk)
    if best is None:
        tm, tk = tm_cands[-1], tk_cands[-1]
    else:
        tm, tk = best[1], best[2]
    return tm, tk, ws(tm, tk)


def graph_convolution(x, adj, weight, bias=None, *, use_bf16=True,
                      vmem_budget_bytes=24 << 20):
    """x: (B, N, F_in), adj: (B, N, N), weight: (F_in, F_out), bias: (F_out,)|None."""
    B, N, F_in = x.shape
    F_out = weight.shape[1]
    out_dtype = x.dtype

    F_in_p = _round_up(F_in, 128)
    F_out_p = _round_up(F_out, 128)
    N_p = _round_up(N, 128)

    stream_dtype = jnp.bfloat16 if use_bf16 else jnp.float32
    stream_item = jnp.dtype(stream_dtype).itemsize

    path_a = F_in <= F_out
    if path_a:
        rhs = x                                    # contract adj against x
        rhs_f_p = F_in_p
        acc_f_p = F_in_p
        weight_bytes = F_in_p * F_out_p * 4
    else:
        # support = x @ W is O(N*F_in*F_out) -- negligible vs the O(N^2*F_out)
        # adjacency contraction; hoist to XLA (f32) and stream its tiles.
        rhs = jnp.einsum("bnf,fo->bno", x, weight)
        rhs_f_p = F_out_p
        acc_f_p = F_out_p
        weight_bytes = 0

    tm, tk, ws = _pick_tiles(N_p, rhs_f_p, F_out_p, acc_f_p, stream_item,
                             weight_bytes, vmem_budget_bytes)

    # Zero-pad (skipped when already aligned); padded rows/cols are zero so
    # they contribute nothing to either matmul, padded output is sliced off.
    adj_p = _pad_to(adj, (B, N_p, N_p)).astype(stream_dtype)
    rhs_p = _pad_to(rhs, (B, N_p, rhs_f_p)).astype(stream_dtype)
    if bias is None:
        b_p = jnp.zeros((1, F_out_p), jnp.float32)
    else:
        b_p = _pad_to(bias.reshape(1, F_out).astype(jnp.float32), (1, F_out_p))

    grid = (B, N_p // tm, N_p // tk)

    adj_spec = pl.BlockSpec((pl.Squeezed(), tm, tk), lambda b, j, k: (b, j, k))
    rhs_spec = pl.BlockSpec((pl.Squeezed(), tk, rhs_f_p), lambda b, j, k: (b, k, 0))
    bias_spec = pl.BlockSpec((1, F_out_p), lambda b, j, k: (0, 0))
    out_spec = pl.BlockSpec((pl.Squeezed(), tm, F_out_p), lambda b, j, k: (b, j, 0))

    if path_a:
        w_p = _pad_to(weight.astype(jnp.float32), (F_in_p, F_out_p))
        w_spec = pl.BlockSpec((F_in_p, F_out_p), lambda b, j, k: (0, 0))
        kernel = _gcn_kernel_path_a
        in_specs = [rhs_spec, adj_spec, w_spec, bias_spec]
        operands = (rhs_p, adj_p, w_p, b_p)
    else:
        kernel = _gcn_kernel_path_b
        in_specs = [rhs_spec, adj_spec, bias_spec]
        operands = (rhs_p, adj_p, b_p)

    # Explicit VMEM budget derived from the tile working set (headroom for
    # Mosaic internals); stays <= 56 MiB so it is safe on v7x's 64 MiB VMEM.
    vmem_limit = int(min(56 << 20, max(2 * ws, 20 << 20)))

    out_p = pl.pallas_call(
        kernel,
        out_shape=jax.ShapeDtypeStruct((B, N_p, F_out_p), out_dtype),
        grid_spec=pltpu.PrefetchScalarGridSpec(
            num_scalar_prefetch=0,
            grid=grid,
            in_specs=in_specs,
            out_specs=out_spec,
            scratch_shapes=[pltpu.VMEM((tm, acc_f_p), jnp.float32)],
        ),
        compiler_params=pltpu.CompilerParams(
            dimension_semantics=("parallel", "parallel", "arbitrary"),
            vmem_limit_bytes=vmem_limit,
        ),
    )(*operands)

    if (N_p, F_out_p) != (N, F_out):
        out_p = out_p[:, :N, :F_out]
    return out_p


if __name__ == "__main__":
    B, N = 2, 8
    in_features, out_features = 16, 32

    key = jax.random.PRNGKey(0)
    kx, kadj, kw, kb = jax.random.split(key, 4)

    # Parameter init mirroring reset_parameters(): uniform(-stdv, stdv),
    # stdv = 1/sqrt(out_features).
    stdv = 1.0 / math.sqrt(out_features)
    weight = jax.random.uniform(
        kw, (in_features, out_features), jnp.float32, -stdv, stdv)
    bias = jax.random.uniform(kb, (out_features,), jnp.float32, -stdv, stdv)
    x = jax.random.normal(kx, (B, N, in_features), jnp.float32)
    adj = jax.random.uniform(kadj, (B, N, N), jnp.float32)

    ref = jnp.einsum("bnm,bmf->bnf", adj, x @ weight) + bias

    # Path A (F_in <= F_out), bf16 streaming (default).
    out = graph_convolution(x, adj, weight, bias)
    jax.block_until_ready(out)
    assert out.shape == (B, N, out_features)
    assert jnp.allclose(out, ref, atol=5e-2, rtol=5e-2), "path A (bf16) mismatch"

    # Path A, exact f32 streaming.
    out_f32 = graph_convolution(x, adj, weight, bias, use_bf16=False)
    jax.block_until_ready(out_f32)
    assert jnp.allclose(out_f32, ref, atol=1e-4, rtol=1e-4), "path A (f32) mismatch"

    # Path B (F_out < F_in): exercises the hoisted-support kernel.
    kw2, kb2, kx2 = jax.random.split(kb, 3)
    in2, out2 = 32, 16
    stdv2 = 1.0 / math.sqrt(out2)
    weight2 = jax.random.uniform(kw2, (in2, out2), jnp.float32, -stdv2, stdv2)
    bias2 = jax.random.uniform(kb2, (out2,), jnp.float32, -stdv2, stdv2)
    x2 = jax.random.normal(kx2, (B, N, in2), jnp.float32)
    ref_b = jnp.einsum("bnm,bmf->bnf", adj, x2 @ weight2) + bias2

    out_b = graph_convolution(x2, adj, weight2, bias2)
    jax.block_until_ready(out_b)
    assert out_b.shape == (B, N, out2)
    assert jnp.allclose(out_b, ref_b, atol=5e-2, rtol=5e-2), "path B (bf16) mismatch"

    out_b_f32 = graph_convolution(x2, adj, weight2, bias2, use_bf16=False)
    jax.block_until_ready(out_b_f32)
    assert jnp.allclose(out_b_f32, ref_b, atol=1e-4, rtol=1e-4), "path B (f32) mismatch"

    # Bias-less branch of the module.
    out_nb = graph_convolution(x, adj, weight, None, use_bf16=False)
    jax.block_until_ready(out_nb)
    ref_nb = jnp.einsum("bnm,bmf->bnf", adj, x @ weight)
    assert jnp.allclose(out_nb, ref_nb, atol=1e-4, rtol=1e-4), "no-bias mismatch"

    print("KERNEL_OK")
</pallas_src>

<mosaic_0001>
module attributes {stable_mosaic.version = 11 : i64} {
  func.func @_gcn_kernel_path_a(%arg0: i32, %arg1: i32, %arg2: i32, %arg3: memref<1x128x128xbf16, #tpu.memory_space<vmem>>, %arg4: memref<1x128x128xbf16, #tpu.memory_space<vmem>>, %arg5: memref<128x128xf32, #tpu.memory_space<vmem>>, %arg6: memref<1x128xf32, #tpu.memory_space<vmem>>, %arg7: memref<1x128x128xf32, #tpu.memory_space<vmem>>, %arg8: memref<128x128xf32, #tpu.memory_space<vmem>>) attributes {dimension_semantics = [#tpu.dimension_semantics<parallel>, #tpu.dimension_semantics<parallel>, #tpu.dimension_semantics<arbitrary>], iteration_bounds = array<i64: 2, 1, 1>, scalar_prefetch = 0 : i64, scratch_operands = 1 : i64, tpu.core_type = #tpu.core_type<tc>, window_params = [{transform_indices = @transform_0, window_bounds = array<i64: 1, 128, 128>}, {transform_indices = @transform_1, window_bounds = array<i64: 1, 128, 128>}, {pipeline_mode = #tpu.pipeline_mode<synchronous>, transform_indices = @transform_2, window_bounds = array<i64: 128, 128>}, {pipeline_mode = #tpu.pipeline_mode<synchronous>, transform_indices = @transform_3, window_bounds = array<i64: 1, 128>}, {transform_indices = @transform_4, window_bounds = array<i64: 1, 128, 128>}]} {
    %c0_i32 = arith.constant 0 : i32
    %0 = arith.cmpi eq, %arg2, %c0_i32 : i32
    %1 = arith.extui %0 : i1 to i32
    %c0_i32_0 = arith.constant 0 : i32
    %2 = arith.cmpi ne, %1, %c0_i32_0 : i32
    scf.if %2 {
      %cst_12 = arith.constant 0.000000e+00 : f32
      %14 = vector.broadcast %cst_12 : f32 to vector<128x128xf32>
      %c0_13 = arith.constant 0 : index
      %c0_14 = arith.constant 0 : index
      %15 = vector.load %arg8[%c0_13, %c0_14] : memref<128x128xf32, #tpu.memory_space<vmem>>, vector<128x128xf32>
      tpu.vector_store %arg8[%c0_13, %c0_14], %14 {strides = array<i32>} : memref<128x128xf32, #tpu.memory_space<vmem>>, vector<128x128xf32>,
    } else {
    }
    %c0 = arith.constant 0 : index
    %c0_1 = arith.constant 0 : index
    %3 = vector.load %arg8[%c0, %c0_1] : memref<128x128xf32, #tpu.memory_space<vmem>>, vector<128x128xf32>
    %c0_2 = arith.constant 0 : index
    %c0_3 = arith.constant 0 : index
    %c0_4 = arith.constant 0 : index
    %4 = vector.load %arg4[%c0_2, %c0_3, %c0_4] : memref<1x128x128xbf16, #tpu.memory_space<vmem>>, vector<1x128x128xbf16>
    %5 = vector.shape_cast %4 : vector<1x128x128xbf16> to vector<128x128xbf16>
    %c0_5 = arith.constant 0 : index
    %c0_6 = arith.constant 0 : index
    %c0_7 = arith.constant 0 : index
    %6 = vector.load %arg3[%c0_5, %c0_6, %c0_7] : memref<1x128x128xbf16, #tpu.memory_space<vmem>>, vector<1x128x128xbf16>
    %7 = vector.shape_cast %6 : vector<1x128x128xbf16> to vector<128x128xbf16>
    %cst = arith.constant dense<0.000000e+00> : vector<128x128xf32>
    %8 = tpu.matmul %5, %7, %cst {dimension_numbers = #tpu.dot_dimension_numbers<[1], [0], [0], [1], [0, 0, 1, 1], [], []>} : vector<128x128xbf16>, vector<128x128xbf16>, vector<128x128xf32> -> vector<128x128xf32>
    %9 = arith.addf %3, %8 : vector<128x128xf32>
    %c0_8 = arith.constant 0 : index
    %c0_9 = arith.constant 0 : index
    %10 = vector.load %arg8[%c0_8, %c0_9] : memref<128x128xf32, #tpu.memory_space<vmem>>, vector<128x128xf32>
    tpu.vector_store %arg8[%c0_8, %c0_9], %9 {strides = array<i32>} : memref<128x128xf32, #tpu.memory_space<vmem>>, vector<128x128xf32>,
    %c0_i32_10 = arith.constant 0 : i32
    %11 = arith.cmpi eq, %arg2, %c0_i32_10 : i32
    %12 = arith.extui %11 : i1 to i32
    %c0_i32_11 = arith.constant 0 : i32
    %13 = arith.cmpi ne, %12, %c0_i32_11 : i32
    scf.if %13 {
      %c0_12 = arith.constant 0 : index
      %c0_13 = arith.constant 0 : index
      %14 = vector.load %arg8[%c0_12, %c0_13] : memref<128x128xf32, #tpu.memory_space<vmem>>, vector<128x128xf32>
      %c0_14 = arith.constant 0 : index
      %c0_15 = arith.constant 0 : index
      %15 = vector.load %arg5[%c0_14, %c0_15] : memref<128x128xf32, #tpu.memory_space<vmem>>, vector<128x128xf32>
      %cst_16 = arith.constant dense<0.000000e+00> : vector<128x128xf32>
      %16 = tpu.matmul %14, %15, %cst_16 {dimension_numbers = #tpu.dot_dimension_numbers<[1], [0], [0], [1], [0, 0, 1, 1], [], []>} : vector<128x128xf32>, vector<128x128xf32>, vector<128x128xf32> -> vector<128x128xf32>
      %c0_17 = arith.constant 0 : index
      %c0_18 = arith.constant 0 : index
      %17 = vector.load %arg6[%c0_17, %c0_18] : memref<1x128xf32, #tpu.memory_space<vmem>>, vector<1x128xf32>
      %18 = vector.broadcast %17 : vector<1x128xf32> to vector<128x128xf32>
      %19 = arith.addf %16, %18 : vector<128x128xf32>
      %c0_19 = arith.constant 0 : index
      %c0_20 = arith.constant 0 : index
      %c0_21 = arith.constant 0 : index
      %20 = vector.load %arg7[%c0_19, %c0_20, %c0_21] : memref<1x128x128xf32, #tpu.memory_space<vmem>>, vector<1x128x128xf32>
      %21 = vector.shape_cast %20 : vector<1x128x128xf32> to vector<128x128xf32>
      %22 = vector.shape_cast %19 : vector<128x128xf32> to vector<1x128x128xf32>
      tpu.vector_store %arg7[%c0_19, %c0_20, %c0_21], %22 {strides = array<i32>} : memref<1x128x128xf32, #tpu.memory_space<vmem>>, vector<1x128x128xf32>,
    } else {
    }
    return
  }
  func.func @transform_0(%arg0: i32, %arg1: i32, %arg2: i32) -> (i32, i32, i32) {
    %c0_i32 = arith.constant 0 : i32
    %c0_i32_0 = arith.constant 0 : i32
    return %arg0, %arg2, %c0_i32 : i32, i32, i32
  }
  func.func @transform_1(%arg0: i32, %arg1: i32, %arg2: i32) -> (i32, i32, i32) {
    %c0_i32 = arith.constant 0 : i32
    return %arg0, %arg1, %arg2 : i32, i32, i32
  }
  func.func @transform_2(%arg0: i32, %arg1: i32, %arg2: i32) -> (i32, i32) {
    %c0_i32 = arith.constant 0 : i32
    %c0_i32_0 = arith.constant 0 : i32
    %c0_i32_1 = arith.constant 0 : i32
    return %c0_i32, %c0_i32_0 : i32, i32
  }
  func.func @transform_3(%arg0: i32, %arg1: i32, %arg2: i32) -> (i32, i32) {
    %c0_i32 = arith.constant 0 : i32
    %c0_i32_0 = arith.constant 0 : i32
    %c0_i32_1 = arith.constant 0 : i32
    return %c0_i32, %c0_i32_0 : i32, i32
  }
  func.func @transform_4(%arg0: i32, %arg1: i32, %arg2: i32) -> (i32, i32, i32) {
    %c0_i32 = arith.constant 0 : i32
    %c0_i32_0 = arith.constant 0 : i32
    return %arg0, %arg1, %c0_i32 : i32, i32, i32
  }
}

</mosaic_0001>

<llo_original>
// kernel: tpu_custom_call.1
$region0: #{tpu_custom_call.1}
  #allocation0 [shape = 'u32[]', space=smem, size = 0x4, offset = 0x4, fixed_abs, tag = 'smem constant byte address 0x4 - core index']
  #allocation1 [shape = 'u32[72,128]{1,0:T(1,128)}', space=vmem, size = 0x9000, scoped, tag = 'internal scratch']
  #allocation2 [shape = 'f32[128,128]{1,0:T(8,128)}', space=vmem, size = 0x10000, scoped, tag = 'scratch operand']
  %s0 = inlined_call_operand.hbm [shape: bf16[2,128,128], index: 0, kind: input, shape index: {}]
  %s1 = inlined_call_operand.hbm [shape: bf16[2,128,128], index: 1, kind: input, shape index: {}]
  %s2 = inlined_call_operand.hbm [shape: f32[128,128], index: 2, kind: input, shape index: {}]
  %s3 = inlined_call_operand.vmem [shape: f32[1,128], index: 3, kind: input, shape index: {}]
  %s4 = inlined_call_operand.hbm [shape: f32[2,128,128], index: 4, kind: output, shape index: {}]
  %s5 = sld [smem:[#allocation0]]
  $region69: #{tpu_custom_call.1} parent=0
    _
  %s7 = ssub.s32 1, %s5
  %s8 = scalar_select 0, %s7, %s5
  $region1: #{tpu_custom_call.1} parent=0
    #allocation3 [shape = 'u8[65536]{0}', space=vmem, size = 0x10000, scoped, tag = 'input window, operand 0']
    #allocation4 [shape = 's32[2]{0}', space=sflag, size = 0x8, scoped, tag = 'scoped memory for tpu_custom_call.1']
    #allocation5 [shape = 's32[2]{0}', space=sflag, size = 0x8, scoped, tag = 'scoped memory for tpu_custom_call.1']
    #allocation6 [shape = 'u8[65536]{0}', space=vmem, size = 0x10000, scoped, tag = 'input window, operand 1']
    #allocation7 [shape = 's32[2]{0}', space=sflag, size = 0x8, scoped, tag = 'scoped memory for tpu_custom_call.1']
    #allocation8 [shape = 'u8[65536]{0}', space=vmem, size = 0x10000, scoped, tag = 'input window, operand 2, single buffered']
    #allocation9 [shape = 'u8[131072]{0}', space=vmem, size = 0x20000, scoped, tag = 'output window, operand 0']
    %9 = vsyncpa [#allocation4], 0
    %s10 = scalar_lea.sflag [#allocation4], 1
    %11 = vsyncpa %s10, 0
    %12 = vsyncpa [#allocation7], 0
    %s13 = scalar_lea.sflag [#allocation7], 1
    %14 = vsyncpa %s13, 0
    %15 = vsyncpa [#allocation5], 0
    %s16 = scalar_lea.sflag [#allocation5], 1
    %17 = vsyncpa %s16, 0
    loop: start=0, step=1, limit=4
    $region2: #{tpu_custom_call.1} parent=1 // loop_pre_header
      _
    $region3: #{tpu_custom_call.1} parent=1 // loop_header
      %s19 = sphi 0, %s23
      %p20 = scmp.ge.s32.totalorder %s19, 4
      %s26 = sphi 0, %s45
      %s27 = sphi 0, %s41
      %s28 = sphi 0, %s37
      %s29 = sphi 0, %s26
      %s30 = sphi 0, %s27
      %s31 = sphi 0, %s28
      %s32 = sphi 0, %s29
      %s33 = sphi 0, %s30
      %s34 = sphi 0, %s31
      %s50 = sphi 0, %s52
      %s53 = sphi 0, %s50
      %s54 = sphi 0, %s53
      %s70 = sphi 0, %s54
      %s80 = sphi 0, %s82
      %s83 = sphi 0, %s80
      %s84 = sphi 0, %s83
      %s100 = sphi 0, %s84
      %s104 = sphi 0, %s104
      %s106 = sphi 0, %s104
      %s107 = sphi 0, %s106
      %s121 = sphi 0, %s107
      %s125 = sphi 0, %s125
      %s127 = sphi 0, %s125
      %s128 = sphi 0, %s127
      %s142 = sphi 0, %s128
      %s150 = sphi 0, %s152
      %s153 = sphi 0, %s150
      %s154 = sphi 0, %s153
      %s170 = sphi 0, %s154
    $region4: #{tpu_custom_call.1} parent=1 // loop_header_branch
      %22 = sbr.rel (%p20) target = $region8
    $region5: #{tpu_custom_call.1} parent=1 // loop_body
      %s24 = ssub.s32 %s19, 1
      %s25 = ssub.s32 %s19, 2
      %s35 = sadd.s32 1, %s28
      %p36 = scmp.ge.s32.totalorder %s35, 1
      %s37 = scalar_select %p36, 0, %s35
      %s38 = sadd.s32 1, %s27
      %s39 = scalar_select %p36, %s38, %s27
      %p40 = scmp.ge.s32.totalorder %s39, 1
      %s41 = scalar_select %p40, 0, %s39
      %s42 = sadd.s32 1, %s26
      %s43 = scalar_select %p40, %s42, %s26
      %p44 = scmp.ge.s32.totalorder %s43, 2
      %s45 = scalar_select %p44, 0, %s43
      %s46 = ssub.s32 %s26, %s45
      %s47 = ssub.s32 %s28, %s37
      %s48 = sor.u32 %s46, %s47
      %p49 = scmp.eq.s32.totalorder %s48, 0
      %s51 = sadd.s32 %s50, 1
      %s52 = scalar_select %p49, %s50, %s51
      %p55 = pneg %p49
      %p56 = scmp.eq.s32.totalorder %s19, 1
      %p57 = por %p55, %p56
      %p58 = scmp.ne.s32.totalorder %s50, %s53
      %p59 = scmp.eq.s32.totalorder %s19, 0
      %p60 = por %p58, %p59
      %p61 = scmp.ne.s32.totalorder %s50, %s53
      %p62 = scmp.eq.s32.totalorder %s24, 1
      %p63 = por %p61, %p62
      %p64 = scmp.ne.s32.totalorder %s53, %s54
      %p65 = scmp.eq.s32.totalorder %s24, 0
      %p66 = por %p64, %p65
      %p67 = scmp.ne.s32.totalorder %s53, %s54
      %p68 = scmp.eq.s32.totalorder %s25, 1
      %p69 = por %p67, %p68
      %p71 = scmp.ne.s32.totalorder %s54, %s70
      %p72 = scmp.eq.s32.totalorder %s25, 0
      %p73 = por %p71, %p72
      %s74 = ssub.s32 %s26, %s45
      %s75 = ssub.s32 %s27, %s41
      %s76 = sor.u32 %s74, %s75
      %s77 = ssub.s32 %s28, %s37
      %s78 = sor.u32 %s76, %s77
      %p79 = scmp.eq.s32.totalorder %s78, 0
      %s81 = sadd.s32 %s80, 1
      %s82 = scalar_select %p79, %s80, %s81
      %p85 = pneg %p79
      %p86 = scmp.eq.s32.totalorder %s19, 1
      %p87 = por %p85, %p86
      %p88 = scmp.ne.s32.totalorder %s80, %s83
      %p89 = scmp.eq.s32.totalorder %s19, 0
      %p90 = por %p88, %p89
      %p91 = scmp.ne.s32.totalorder %s80, %s83
      %p92 = scmp.eq.s32.totalorder %s24, 1
      %p93 = por %p91, %p92
      %p94 = scmp.ne.s32.totalorder %s83, %s84
      %p95 = scmp.eq.s32.totalorder %s24, 0
      %p96 = por %p94, %p95
      %p97 = scmp.ne.s32.totalorder %s83, %s84
      %p98 = scmp.eq.s32.totalorder %s25, 1
      %p99 = por %p97, %p98
      %p101 = scmp.ne.s32.totalorder %s84, %s100
      %p102 = scmp.eq.s32.totalorder %s25, 0
      %p103 = por %p101, %p102
      %s105 = sadd.s32 %s104, 1
      %p108 = scmp.eq.s32.totalorder %s19, 1
      %p109 = scmp.ne.s32.totalorder %s104, %s106
      %p110 = scmp.eq.s32.totalorder %s19, 0
      %p111 = por %p109, %p110
      %p112 = scmp.ne.s32.totalorder %s104, %s106
      %p113 = scmp.eq.s32.totalorder %s24, 1
      %p114 = por %p112, %p113
      %p115 = scmp.ne.s32.totalorder %s106, %s107
      %p116 = scmp.eq.s32.totalorder %s24, 0
      %p117 = por %p115, %p116
      %p118 = scmp.ne.s32.totalorder %s106, %s107
      %p119 = scmp.eq.s32.totalorder %s25, 1
      %p120 = por %p118, %p119
      %p122 = scmp.ne.s32.totalorder %s107, %s121
      %p123 = scmp.eq.s32.totalorder %s25, 0
      %p124 = por %p122, %p123
      %s126 = sadd.s32 %s125, 1
      %p129 = scmp.eq.s32.totalorder %s19, 1
      %p130 = scmp.ne.s32.totalorder %s125, %s127
      %p131 = scmp.eq.s32.totalorder %s19, 0
      %p132 = por %p130, %p131
      %p133 = scmp.ne.s32.totalorder %s125, %s127
      %p134 = scmp.eq.s32.totalorder %s24, 1
      %p135 = por %p133, %p134
      %p136 = scmp.ne.s32.totalorder %s127, %s128
      %p137 = scmp.eq.s32.totalorder %s24, 0
      %p138 = por %p136, %p137
      %p139 = scmp.ne.s32.totalorder %s127, %s128
      %p140 = scmp.eq.s32.totalorder %s25, 1
      %p141 = por %p139, %p140
      %p143 = scmp.ne.s32.totalorder %s128, %s142
      %p144 = scmp.eq.s32.totalorder %s25, 0
      %p145 = por %p143, %p144
      %s146 = ssub.s32 %s26, %s45
      %s147 = ssub.s32 %s27, %s41
      %s148 = sor.u32 %s146, %s147
      %p149 = scmp.eq.s32.totalorder %s148, 0
      %s151 = sadd.s32 %s150, 1
      %s152 = scalar_select %p149, %s150, %s151
      %p155 = pneg %p149
      %p156 = scmp.eq.s32.totalorder %s19, 1
      %p157 = por %p155, %p156
      %p158 = scmp.ne.s32.totalorder %s150, %s153
      %p159 = scmp.eq.s32.totalorder %s19, 0
      %p160 = por %p158, %p159
      %p161 = scmp.ne.s32.totalorder %s150, %s153
      %p162 = scmp.eq.s32.totalorder %s24, 1
      %p163 = por %p161, %p162
      %p164 = scmp.ne.s32.totalorder %s153, %s154
      %p165 = scmp.eq.s32.totalorder %s24, 0
      %p166 = por %p164, %p165
      %p167 = scmp.ne.s32.totalorder %s153, %s154
      %p168 = scmp.eq.s32.totalorder %s25, 1
      %p169 = por %p167, %p168
      %p171 = scmp.ne.s32.totalorder %s154, %s170
      %p172 = scmp.eq.s32.totalorder %s25, 0
      %p173 = por %p171, %p172
      %p174 = scmp.le.s32.totalorder 1, %s19
      %p175 = scmp.lt.s32.totalorder %s19, 3
      %p176 = pnand %p174, %p175
      %p177 = pneg %p176
      // Predicated region
      $region9: #{tpu_custom_call.1} parent=5 // pred_check
        _
      $region10: #{tpu_custom_call.1} parent=5 // pred_check_branch
        %179 = sbr.rel (%p176) target = $region12
      $region11: #{tpu_custom_call.1} parent=5 // pred_region
        %s180 = ssub.s32 %s19, 1
        // Predicated region
        $region13: #{tpu_custom_call.1} parent=11 // pred_check
          %p181 = pneg %p117
        $region14: #{tpu_custom_call.1} parent=11 // pred_check_branch
          %183 = sbr.rel (%p181) target = $region16
        $region15: #{tpu_custom_call.1} parent=11 // pred_region
          %185 = vsyncadd [#allocation7], 0
          %s186 = sshll.u32 %s2, 4
          %s187 = int_to_ptr.hbm [resolvable:$true] %s186
          %s188 = sshll.u32 [#allocation8], 4
          %s189 = int_to_ptr.vmem [resolvable:$true] %s188
          %194 = dma.hbm_to_vmem [thread:$0]  %s187, 2048, %s189, [#allocation7], 128, 128, 8
        $region16: #{tpu_custom_call.1} parent=11 // pred_fallthru
          _
        // Predicated region
        $region17: #{tpu_custom_call.1} parent=11 // pred_check
          %p195 = pneg %p138
        $region18: #{tpu_custom_call.1} parent=11 // pred_check_branch
          %197 = sbr.rel (%p195) target = $region20
        $region19: #{tpu_custom_call.1} parent=11 // pred_region
          _
        $region20: #{tpu_custom_call.1} parent=11 // pred_fallthru
          _
      $region12: #{tpu_custom_call.1} parent=5 // pred_fallthru
        _
      %p198 = scmp.lt.s32.totalorder %s19, 2
      // Predicated region
      $region21: #{tpu_custom_call.1} parent=5 // pred_check
        %p199 = pneg %p198
      $region22: #{tpu_custom_call.1} parent=5 // pred_check_branch
        %201 = sbr.rel (%p199) target = $region24
      $region23: #{tpu_custom_call.1} parent=5 // pred_region
        // Predicated region
        $region25: #{tpu_custom_call.1} parent=23 // pred_check
          %p202 = pneg %p60
        $region26: #{tpu_custom_call.1} parent=23 // pred_check_branch
          %204 = sbr.rel (%p202) target = $region28
        $region27: #{tpu_custom_call.1} parent=23 // pred_region
          %s205 = sand.u32 %s50, 1
          %s206 = scalar_lea.sflag [#allocation4], %s205
          %s207 = sand.u32 %s50, 1
          %s208 = smul.addr %s207, 64
          %s209 = scalar_lea.vmem [#allocation3], %s208
          %s210 = smul.u32 16, %s28
          %212 = vsyncadd %s206, 0
          %s213 = smul.addr %s26, 16
          %s214 = sadd.s32 %s210, %s213
          %s215 = smul.addr %s214, 4
          %s216 = scalar_lea.hbm %s0, %s215
          %s217 = sshll.u32 %s216, 4
          %s218 = int_to_ptr.hbm [resolvable:$true] %s217
          %s219 = sshll.u32 %s209, 4
          %s220 = int_to_ptr.vmem [resolvable:$true] %s219
          %225 = dma.hbm_to_vmem [thread:$0]  %s218, 1024, %s220, %s206, 64, 64, 4
        $region28: #{tpu_custom_call.1} parent=23 // pred_fallthru
          _
        // Predicated region
        $region29: #{tpu_custom_call.1} parent=23 // pred_check
          %p226 = pneg %p90
        $region30: #{tpu_custom_call.1} parent=23 // pred_check_branch
          %228 = sbr.rel (%p226) target = $region32
        $region31: #{tpu_custom_call.1} parent=23 // pred_region
          %s229 = sand.u32 %s19, 1
          %s230 = scalar_lea.sflag [#allocation7], %s229
          %s231 = sand.u32 %s80, 1
          %s232 = smul.addr %s231, 64
          %s233 = scalar_lea.vmem [#allocation6], %s232
          %s234 = smul.u32 16, %s27
          %236 = vsyncadd %s230, 0
          %s237 = sadd.s32 %s28, %s234
          %s238 = smul.addr %s26, 16
          %s239 = sadd.s32 %s237, %s238
          %s240 = smul.addr %s239, 4
          %s241 = scalar_lea.hbm %s1, %s240
          %s242 = sshll.u32 %s241, 4
          %s243 = int_to_ptr.hbm [resolvable:$true] %s242
          %s244 = sshll.u32 %s233, 4
          %s245 = int_to_ptr.vmem [resolvable:$true] %s244
          %250 = dma.hbm_to_vmem [thread:$0]  %s243, 1024, %s245, %s230, 64, 64, 4
        $region32: #{tpu_custom_call.1} parent=23 // pred_fallthru
          _
      $region24: #{tpu_custom_call.1} parent=5 // pred_fallthru
        _
      %p251 = scmp.le.s32.totalorder 1, %s19
      %p252 = scmp.lt.s32.totalorder %s19, 3
      %p253 = pnand %p251, %p252
      %p254 = pneg %p253
      // Predicated region
      $region33: #{tpu_custom_call.1} parent=5 // pred_check
        _
      $region34: #{tpu_custom_call.1} parent=5 // pred_check_branch
        %256 = sbr.rel (%p253) target = $region36
      $region35: #{tpu_custom_call.1} parent=5 // pred_region
        %s257 = ssub.s32 %s19, 1
        %s258 = sand.u32 %s53, 1
        %s259 = scalar_lea.sflag [#allocation4], %s258
        %s260 = sand.u32 %s53, 1
        %s261 = smul.addr %s260, 64
        %s262 = scalar_lea.vmem [#allocation3], %s261
        // Predicated region
        $region37: #{tpu_custom_call.1} parent=35 // pred_check
          %p263 = pneg %p66
        $region38: #{tpu_custom_call.1} parent=35 // pred_check_branch
          %265 = sbr.rel (%p263) target = $region40
        $region39: #{tpu_custom_call.1} parent=35 // pred_region
          %267 = dma.done %s259, 1024
        $region40: #{tpu_custom_call.1} parent=35 // pred_fallthru
          _
        %s268 = sand.u32 %s24, 1
        %s269 = scalar_lea.sflag [#allocation7], %s268
        %s270 = sand.u32 %s83, 1
        %s271 = smul.addr %s270, 64
        %s272 = scalar_lea.vmem [#allocation6], %s271
        // Predicated region
        $region41: #{tpu_custom_call.1} parent=35 // pred_check
          %p273 = pneg %p96
        $region42: #{tpu_custom_call.1} parent=35 // pred_check_branch
          %275 = sbr.rel (%p273) target = $region44
        $region43: #{tpu_custom_call.1} parent=35 // pred_region
          %277 = dma.done %s269, 1024
        $region44: #{tpu_custom_call.1} parent=35 // pred_fallthru
          _
        // Predicated region
        $region45: #{tpu_custom_call.1} parent=35 // pred_check
          %p278 = pneg %p117
        $region46: #{tpu_custom_call.1} parent=35 // pred_check_branch
          %280 = sbr.rel (%p278) target = $region48
        $region47: #{tpu_custom_call.1} parent=35 // pred_region
          %282 = dma.done [#allocation7], 2048
        $region48: #{tpu_custom_call.1} parent=35 // pred_fallthru
          _
        %s283 = sand.u32 %s53, 1
        %s284 = scalar_lea.sflag [#allocation4], %s283
        %s285 = sand.u32 %s53, 1
        %s286 = smul.addr %s285, 64
        %s287 = scalar_lea.vmem [#allocation3], %s286
        %p288 = pneg %p66
        %p289 = pneg %p63
        %s290 = sand.u32 %s24, 1
        %s291 = scalar_lea.sflag [#allocation7], %s290
        %s292 = sand.u32 %s83, 1
        %s293 = smul.addr %s292, 64
        %s294 = scalar_lea.vmem [#allocation6], %s293
        %p295 = pneg %p96
        %p296 = pneg %p93
        %p297 = pneg %p117
        %p298 = pneg %p114
        %p299 = pneg %p138
        %p300 = pneg %p135
        %p301 = pneg %p166
        %p302 = pneg %p163
        %s303 = sand.u32 %s153, 1
        %s304 = scalar_lea.sflag [#allocation5], %s303
        %s305 = sand.u32 %s153, 1
        %s306 = smul.addr %s305, 128
        %s307 = scalar_lea.vmem [#allocation9], %s306
        %s308 = smul.u32 16, %s31
        %s309 = smul.u32 16, %s30
        %s310 = smul.u32 16, %s30
        %p311 = scmp.eq.s32.totalorder %s31, 0
        // Predicated region
        $region49: #{tpu_custom_call.1} parent=35 // pred_check
          %p312 = pneg %p311
        $region50: #{tpu_custom_call.1} parent=35 // pred_check_branch
          %314 = sbr.rel (%p312) target = $region52
        $region51: #{tpu_custom_call.1} parent=35 // pred_region
          %315 = vst [vmem:[#allocation2] sm:$0xff] 0.0
          %316 = vst [vmem:[#allocation2 + $0x8] sm:$0xff] 0.0
          %317 = vst [vmem:[#allocation2 + $0x10] sm:$0xff] 0.0
          %318 = vst [vmem:[#allocation2 + $0x18] sm:$0xff] 0.0
          %319 = vst [vmem:[#allocation2 + $0x20] sm:$0xff] 0.0
          %320 = vst [vmem:[#allocation2 + $0x28] sm:$0xff] 0.0
          %321 = vst [vmem:[#allocation2 + $0x30] sm:$0xff] 0.0
          %322 = vst [vmem:[#allocation2 + $0x38] sm:$0xff] 0.0
          %323 = vst [vmem:[#allocation2 + $0x40] sm:$0xff] 0.0
          %324 = vst [vmem:[#allocation2 + $0x48] sm:$0xff] 0.0
          %325 = vst [vmem:[#allocation2 + $0x50] sm:$0xff] 0.0
          %326 = vst [vmem:[#allocation2 + $0x58] sm:$0xff] 0.0
          %327 = vst [vmem:[#allocation2 + $0x60] sm:$0xff] 0.0
          %328 = vst [vmem:[#allocation2 + $0x68] sm:$0xff] 0.0
          %329 = vst [vmem:[#allocation2 + $0x70] sm:$0xff] 0.0
          %330 = vst [vmem:[#allocation2 + $0x78] sm:$0xff] 0.0
        $region52: #{tpu_custom_call.1} parent=35 // pred_fallthru
          _
        %v331 = vld [vmem:[#allocation2] sm:$0xff]
        %v332 = vld [vmem:[#allocation2 + $0x8] sm:$0xff]
        %v333 = vld [vmem:[#allocation2 + $0x10] sm:$0xff]
        %v334 = vld [vmem:[#allocation2 + $0x18] sm:$0xff]
        %v335 = vld [vmem:[#allocation2 + $0x20] sm:$0xff]
        %v336 = vld [vmem:[#allocation2 + $0x28] sm:$0xff]
        %v337 = vld [vmem:[#allocation2 + $0x30] sm:$0xff]
        %v338 = vld [vmem:[#allocation2 + $0x38] sm:$0xff]
        %v339 = vld [vmem:[#allocation2 + $0x40] sm:$0xff]
        %v340 = vld [vmem:[#allocation2 + $0x48] sm:$0xff]
        %v341 = vld [vmem:[#allocation2 + $0x50] sm:$0xff]
        %v342 = vld [vmem:[#allocation2 + $0x58] sm:$0xff]
        %v343 = vld [vmem:[#allocation2 + $0x60] sm:$0xff]
        %v344 = vld [vmem:[#allocation2 + $0x68] sm:$0xff]
        %v345 = vld [vmem:[#allocation2 + $0x70] sm:$0xff]
        %v346 = vld [vmem:[#allocation2 + $0x78] sm:$0xff]
        %v347 = vld [vmem:[%s272] sm:$0xf]
        %v348 = vld [vmem:[%s272 + $0x4] sm:$0xf]
        %v349 = vld [vmem:[%s272 + $0x8] sm:$0xf]
        %v350 = vld [vmem:[%s272 + $0xc] sm:$0xf]
        %v351 = vld [vmem:[%s272 + $0x10] sm:$0xf]
        %v352 = vld [vmem:[%s272 + $0x14] sm:$0xf]
        %v353 = vld [vmem:[%s272 + $0x18] sm:$0xf]
        %v354 = vld [vmem:[%s272 + $0x1c] sm:$0xf]
        %v355 = vld [vmem:[%s272 + $0x20] sm:$0xf]
        %v356 = vld [vmem:[%s272 + $0x24] sm:$0xf]
        %v357 = vld [vmem:[%s272 + $0x28] sm:$0xf]
        %v358 = vld [vmem:[%s272 + $0x2c] sm:$0xf]
        %v359 = vld [vmem:[%s272 + $0x30] sm:$0xf]
        %v360 = vld [vmem:[%s272 + $0x34] sm:$0xf]
        %v361 = vld [vmem:[%s272 + $0x38] sm:$0xf]
        %v362 = vld [vmem:[%s272 + $0x3c] sm:$0xf]
        %v363 = vld [vmem:[%s262] sm:$0xf]
        %v364 = vld [vmem:[%s262 + $0x4] sm:$0xf]
        %v365 = vld [vmem:[%s262 + $0x8] sm:$0xf]
        %v366 = vld [vmem:[%s262 + $0xc] sm:$0xf]
        %v367 = vld [vmem:[%s262 + $0x10] sm:$0xf]
        %v368 = vld [vmem:[%s262 + $0x14] sm:$0xf]
        %v369 = vld [vmem:[%s262 + $0x18] sm:$0xf]
        %v370 = vld [vmem:[%s262 + $0x1c] sm:$0xf]
        %v371 = vld [vmem:[%s262 + $0x20] sm:$0xf]
        %v372 = vld [vmem:[%s262 + $0x24] sm:$0xf]
        %v373 = vld [vmem:[%s262 + $0x28] sm:$0xf]
        %v374 = vld [vmem:[%s262 + $0x2c] sm:$0xf]
        %v375 = vld [vmem:[%s262 + $0x30] sm:$0xf]
        %v376 = vld [vmem:[%s262 + $0x34] sm:$0xf]
        %v377 = vld [vmem:[%s262 + $0x38] sm:$0xf]
        %v378 = vld [vmem:[%s262 + $0x3c] sm:$0xf]
        %v395 = vunpack.c.l.b16 %v347
        %v396 = vunpack.c.l.b16 %v348
        %v397 = vunpack.c.l.b16 %v349
        %v398 = vunpack.c.l.b16 %v350
        %v399 = vunpack.c.l.b16 %v351
        %v400 = vunpack.c.l.b16 %v352
        %v401 = vunpack.c.l.b16 %v353
        %v402 = vunpack.c.l.b16 %v354
        %v403 = vunpack.c.l.b16 %v355
        %v404 = vunpack.c.l.b16 %v356
        %v405 = vunpack.c.l.b16 %v357
        %v406 = vunpack.c.l.b16 %v358
        %v407 = vunpack.c.l.b16 %v359
        %v408 = vunpack.c.l.b16 %v360
        %v409 = vunpack.c.l.b16 %v361
        %v410 = vunpack.c.l.b16 %v362
        %v411 = vpack.c.b16 %v396, %v395
        %v412 = vpack.c.b16 %v398, %v397
        %v413 = vpack.c.b16 %v400, %v399
        %v414 = vpack.c.b16 %v402, %v401
        %v415 = vpack.c.b16 %v404, %v403
        %v416 = vpack.c.b16 %v406, %v405
        %v417 = vpack.c.b16 %v408, %v407
        %v418 = vpack.c.b16 %v410, %v409
        %v443 = vunpack.c.l.b16 %v363
        %v444 = vunpack.c.l.b16 %v364
        %v445 = vunpack.c.l.b16 %v365
        %v446 = vunpack.c.l.b16 %v366
        %v447 = vunpack.c.l.b16 %v367
        %v448 = vunpack.c.l.b16 %v368
        %v449 = vunpack.c.l.b16 %v369
        %v450 = vunpack.c.l.b16 %v370
        %v451 = vunpack.c.l.b16 %v371
        %v452 = vunpack.c.l.b16 %v372
        %v453 = vunpack.c.l.b16 %v373
        %v454 = vunpack.c.l.b16 %v374
        %v455 = vunpack.c.l.b16 %v375
        %v456 = vunpack.c.l.b16 %v376
        %v457 = vunpack.c.l.b16 %v377
        %v458 = vunpack.c.l.b16 %v378
        %v459 = vpack.c.b16 %v444, %v443
        %v460 = vpack.c.b16 %v446, %v445
        %v461 = vpack.c.b16 %v448, %v447
        %v462 = vpack.c.b16 %v450, %v449
        %v463 = vpack.c.b16 %v452, %v451
        %v464 = vpack.c.b16 %v454, %v453
        %v465 = vpack.c.b16 %v456, %v455
        %v466 = vpack.c.b16 %v458, %v457
        %475 = vmatpush.bf16.msra.mxu0 %v466
        %476 = vmatpush.bf16.msra.mxu0 %v465
        %477 = vmatpush.bf16.msra.mxu0 %v464
        %478 = vmatpush.bf16.msra.mxu0 %v463
        %479 = vmatpush.bf16.msra.mxu0 %v462
        %480 = vmatpush.bf16.msra.mxu0 %v461
        %481 = vmatpush.bf16.msra.mxu0 %v460
        %482 = vmatpush.bf16.msra.mxu0 %v459
        %483 = vmatmul.bf16.gmra.mxu0 %v411
        %v484 = vpop.f32.mrf.mxu0
        %v485 = vadd.f32 0.0, %v484
        %v486 = vpop.f32.mrf.mxu0
        %v487 = vadd.f32 0.0, %v486
        %488 = vmatmul.bf16.gmra.mxu0 %v412
        %v489 = vpop.f32.mrf.mxu0
        %v490 = vadd.f32 0.0, %v489
        %v491 = vpop.f32.mrf.mxu0
        %v492 = vadd.f32 0.0, %v491
        %493 = vmatmul.bf16.gmra.mxu0 %v413
        %v494 = vpop.f32.mrf.mxu0
        %v495 = vadd.f32 0.0, %v494
        %v496 = vpop.f32.mrf.mxu0
        %v497 = vadd.f32 0.0, %v496
        %498 = vmatmul.bf16.gmra.mxu0 %v414
        %v499 = vpop.f32.mrf.mxu0
        %v500 = vadd.f32 0.0, %v499
        %v501 = vpop.f32.mrf.mxu0
        %v502 = vadd.f32 0.0, %v501
        %503 = vmatmul.bf16.gmra.mxu0 %v415
        %v504 = vpop.f32.mrf.mxu0
        %v505 = vadd.f32 0.0, %v504
        %v506 = vpop.f32.mrf.mxu0
        %v507 = vadd.f32 0.0, %v506
        %508 = vmatmul.bf16.gmra.mxu0 %v416
        %v509 = vpop.f32.mrf.mxu0
        %v510 = vadd.f32 0.0, %v509
        %v511 = vpop.f32.mrf.mxu0
        %v512 = vadd.f32 0.0, %v511
        %513 = vmatmul.bf16.gmra.mxu0 %v417
        %v514 = vpop.f32.mrf.mxu0
        %v515 = vadd.f32 0.0, %v514
        %v516 = vpop.f32.mrf.mxu0
        %v517 = vadd.f32 0.0, %v516
        %518 = vmatmul.bf16.gmra.mxu0 %v418
        %v519 = vpop.f32.mrf.mxu0
        %v520 = vadd.f32 0.0, %v519
        %v521 = vpop.f32.mrf.mxu0
        %v522 = vadd.f32 0.0, %v521
        %523 = vdwg.mxu0
        %v524 = vadd.f32 %v331, %v485
        %v525 = vadd.f32 %v332, %v487
        %v526 = vadd.f32 %v333, %v490
        %v527 = vadd.f32 %v334, %v492
        %v528 = vadd.f32 %v335, %v495
        %v529 = vadd.f32 %v336, %v497
        %v530 = vadd.f32 %v337, %v500
        %v531 = vadd.f32 %v338, %v502
        %v532 = vadd.f32 %v339, %v505
        %v533 = vadd.f32 %v340, %v507
        %v534 = vadd.f32 %v341, %v510
        %v535 = vadd.f32 %v342, %v512
        %v536 = vadd.f32 %v343, %v515
        %v537 = vadd.f32 %v344, %v517
        %v538 = vadd.f32 %v345, %v520
        %v539 = vadd.f32 %v346, %v522
        %540 = vst [vmem:[#allocation2] sm:$0xff] %v524
        %541 = vst [vmem:[#allocation2 + $0x8] sm:$0xff] %v525
        %542 = vst [vmem:[#allocation2 + $0x10] sm:$0xff] %v526
        %543 = vst [vmem:[#allocation2 + $0x18] sm:$0xff] %v527
        %544 = vst [vmem:[#allocation2 + $0x20] sm:$0xff] %v528
        %545 = vst [vmem:[#allocation2 + $0x28] sm:$0xff] %v529
        %546 = vst [vmem:[#allocation2 + $0x30] sm:$0xff] %v530
        %547 = vst [vmem:[#allocation2 + $0x38] sm:$0xff] %v531
        %548 = vst [vmem:[#allocation2 + $0x40] sm:$0xff] %v532
        %549 = vst [vmem:[#allocation2 + $0x48] sm:$0xff] %v533
        %550 = vst [vmem:[#allocation2 + $0x50] sm:$0xff] %v534
        %551 = vst [vmem:[#allocation2 + $0x58] sm:$0xff] %v535
        %552 = vst [vmem:[#allocation2 + $0x60] sm:$0xff] %v536
        %553 = vst [vmem:[#allocation2 + $0x68] sm:$0xff] %v537
        %554 = vst [vmem:[#allocation2 + $0x70] sm:$0xff] %v538
        %555 = vst [vmem:[#allocation2 + $0x78] sm:$0xff] %v539
        // Predicated region
        $region53: #{tpu_custom_call.1} parent=35 // pred_check
          %p556 = pneg %p311
        $region54: #{tpu_custom_call.1} parent=35 // pred_check_branch
          %558 = sbr.rel (%p556) target = $region56
        $region55: #{tpu_custom_call.1} parent=35 // pred_region
          %v559 = vld [vmem:[#allocation2] sm:$0xff]
          %v560 = vld [vmem:[#allocation2 + $0x8] sm:$0xff]
          %v561 = vld [vmem:[#allocation2 + $0x10] sm:$0xff]
          %v562 = vld [vmem:[#allocation2 + $0x18] sm:$0xff]
          %v563 = vld [vmem:[#allocation2 + $0x20] sm:$0xff]
          %v564 = vld [vmem:[#allocation2 + $0x28] sm:$0xff]
          %v565 = vld [vmem:[#allocation2 + $0x30] sm:$0xff]
          %v566 = vld [vmem:[#allocation2 + $0x38] sm:$0xff]
          %v567 = vld [vmem:[#allocation2 + $0x40] sm:$0xff]
          %v568 = vld [vmem:[#allocation2 + $0x48] sm:$0xff]
          %v569 = vld [vmem:[#allocation2 + $0x50] sm:$0xff]
          %v570 = vld [vmem:[#allocation2 + $0x58] sm:$0xff]
          %v571 = vld [vmem:[#allocation2 + $0x60] sm:$0xff]
          %v572 = vld [vmem:[#allocation2 + $0x68] sm:$0xff]
          %v573 = vld [vmem:[#allocation2 + $0x70] sm:$0xff]
          %v574 = vld [vmem:[#allocation2 + $0x78] sm:$0xff]
          %v575 = vld [vmem:[#allocation8] sm:$0xff]
          %v576 = vld [vmem:[#allocation8 + $0x8] sm:$0xff]
          %v577 = vld [vmem:[#allocation8 + $0x10] sm:$0xff]
          %v578 = vld [vmem:[#allocation8 + $0x18] sm:$0xff]
          %v579 = vld [vmem:[#allocation8 + $0x20] sm:$0xff]
          %v580 = vld [vmem:[#allocation8 + $0x28] sm:$0xff]
          %v581 = vld [vmem:[#allocation8 + $0x30] sm:$0xff]
          %v582 = vld [vmem:[#allocation8 + $0x38] sm:$0xff]
          %v583 = vld [vmem:[#allocation8 + $0x40] sm:$0xff]
          %v584 = vld [vmem:[#allocation8 + $0x48] sm:$0xff]
          %v585 = vld [vmem:[#allocation8 + $0x50] sm:$0xff]
          %v586 = vld [vmem:[#allocation8 + $0x58] sm:$0xff]
          %v587 = vld [vmem:[#allocation8 + $0x60] sm:$0xff]
          %v588 = vld [vmem:[#allocation8 + $0x68] sm:$0xff]
          %v589 = vld [vmem:[#allocation8 + $0x70] sm:$0xff]
          %v590 = vld [vmem:[#allocation8 + $0x78] sm:$0xff]
          %v591 = vld [vmem:[%s3] sm:$0x1]
          %v593 = vperm.slane %v591, 0
          %595 = vmatpush.msra.mxu0 %v590
          %596 = vmatpush.msra.mxu0 %v589
          %597 = vmatpush.msra.mxu0 %v588
          %598 = vmatpush.msra.mxu0 %v587
          %599 = vmatpush.msra.mxu0 %v586
          %600 = vmatpush.msra.mxu0 %v585
          %601 = vmatpush.msra.mxu0 %v584
          %602 = vmatpush.msra.mxu0 %v583
          %603 = vmatpush.msra.mxu0 %v582
          %604 = vmatpush.msra.mxu0 %v581
          %605 = vmatpush.msra.mxu0 %v580
          %606 = vmatpush.msra.mxu0 %v579
          %607 = vmatpush.msra.mxu0 %v578
          %608 = vmatpush.msra.mxu0 %v577
          %609 = vmatpush.msra.mxu0 %v576
          %610 = vmatpush.msra.mxu0 %v575
          %611 = vmatmul.f32.gmra.mxu0 %v559
          %v612 = vpop.f32.mrf.mxu0
          %v613 = vadd.f32 %v593, %v612
          %614 = vmatmul.f32.gmra.mxu0 %v560
          %v615 = vpop.f32.mrf.mxu0
          %v616 = vadd.f32 %v593, %v615
          %617 = vmatmul.f32.gmra.mxu0 %v561
          %v618 = vpop.f32.mrf.mxu0
          %v619 = vadd.f32 %v593, %v618
          %620 = vmatmul.f32.gmra.mxu0 %v562
          %v621 = vpop.f32.mrf.mxu0
          %v622 = vadd.f32 %v593, %v621
          %623 = vmatmul.f32.gmra.mxu0 %v563
          %v624 = vpop.f32.mrf.mxu0
          %v625 = vadd.f32 %v593, %v624
          %626 = vmatmul.f32.gmra.mxu0 %v564
          %v627 = vpop.f32.mrf.mxu0
          %v628 = vadd.f32 %v593, %v627
          %629 = vmatmul.f32.gmra.mxu0 %v565
          %v630 = vpop.f32.mrf.mxu0
          %v631 = vadd.f32 %v593, %v630
          %632 = vmatmul.f32.gmra.mxu0 %v566
          %v633 = vpop.f32.mrf.mxu0
          %v634 = vadd.f32 %v593, %v633
          %635 = vmatmul.f32.gmra.mxu0 %v567
          %v636 = vpop.f32.mrf.mxu0
          %v637 = vadd.f32 %v593, %v636
          %638 = vmatmul.f32.gmra.mxu0 %v568
          %v639 = vpop.f32.mrf.mxu0
          %v640 = vadd.f32 %v593, %v639
          %641 = vmatmul.f32.gmra.mxu0 %v569
          %v642 = vpop.f32.mrf.mxu0
          %v643 = vadd.f32 %v593, %v642
          %644 = vmatmul.f32.gmra.mxu0 %v570
          %v645 = vpop.f32.mrf.mxu0
          %v646 = vadd.f32 %v593, %v645
          %647 = vmatmul.f32.gmra.mxu0 %v571
          %v648 = vpop.f32.mrf.mxu0
          %v649 = vadd.f32 %v593, %v648
          %650 = vmatmul.f32.gmra.mxu0 %v572
          %v651 = vpop.f32.mrf.mxu0
          %v652 = vadd.f32 %v593, %v651
          %653 = vmatmul.f32.gmra.mxu0 %v573
          %v654 = vpop.f32.mrf.mxu0
          %v655 = vadd.f32 %v593, %v654
          %656 = vmatmul.f32.gmra.mxu0 %v574
          %v657 = vpop.f32.mrf.mxu0
          %v658 = vadd.f32 %v593, %v657
          %659 = vdwg.mxu0
          %660 = vst [vmem:[%s307] sm:$0xff] %v613
          %661 = vst [vmem:[%s307 + $0x8] sm:$0xff] %v616
          %662 = vst [vmem:[%s307 + $0x10] sm:$0xff] %v619
          %663 = vst [vmem:[%s307 + $0x18] sm:$0xff] %v622
          %664 = vst [vmem:[%s307 + $0x20] sm:$0xff] %v625
          %665 = vst [vmem:[%s307 + $0x28] sm:$0xff] %v628
          %666 = vst [vmem:[%s307 + $0x30] sm:$0xff] %v631
          %667 = vst [vmem:[%s307 + $0x38] sm:$0xff] %v634
          %668 = vst [vmem:[%s307 + $0x40] sm:$0xff] %v637
          %669 = vst [vmem:[%s307 + $0x48] sm:$0xff] %v640
          %670 = vst [vmem:[%s307 + $0x50] sm:$0xff] %v643
          %671 = vst [vmem:[%s307 + $0x58] sm:$0xff] %v646
          %672 = vst [vmem:[%s307 + $0x60] sm:$0xff] %v649
          %673 = vst [vmem:[%s307 + $0x68] sm:$0xff] %v652
          %674 = vst [vmem:[%s307 + $0x70] sm:$0xff] %v655
          %675 = vst [vmem:[%s307 + $0x78] sm:$0xff] %v658
        $region56: #{tpu_custom_call.1} parent=35 // pred_fallthru
          _
        %s676 = sand.u32 %s153, 1
        %s677 = scalar_lea.sflag [#allocation5], %s676
        %s678 = sand.u32 %s153, 1
        %s679 = smul.addr %s678, 128
        %s680 = scalar_lea.vmem [#allocation9], %s679
        // Predicated region
        $region57: #{tpu_custom_call.1} parent=35 // pred_check
          %p681 = pneg %p163
        $region58: #{tpu_custom_call.1} parent=35 // pred_check_branch
          %683 = sbr.rel (%p681) target = $region60
        $region59: #{tpu_custom_call.1} parent=35 // pred_region
          %s684 = smul.u32 16, %s30
          %686 = vsyncadd %s677, 0
          %s687 = smul.addr %s29, 16
          %s688 = sadd.s32 %s684, %s687
          %s689 = smul.addr %s688, 8
          %s690 = scalar_lea.hbm %s4, %s689
          %s691 = sshll.u32 %s680, 4
          %s692 = int_to_ptr.vmem [resolvable:$true] %s691
          %s693 = sshll.u32 %s690, 4
          %s694 = int_to_ptr.hbm [resolvable:$true] %s693
          %699 = dma.vmem_to_hbm [thread:$0]  %s692, 2048, %s694, %s677, 128, 128, 8
        $region60: #{tpu_custom_call.1} parent=35 // pred_fallthru
          _
      $region36: #{tpu_custom_call.1} parent=5 // pred_fallthru
        _
      %p700 = scmp.le.s32.totalorder 2, %s19
      // Predicated region
      $region61: #{tpu_custom_call.1} parent=5 // pred_check
        %p701 = pneg %p700
      $region62: #{tpu_custom_call.1} parent=5 // pred_check_branch
        %703 = sbr.rel (%p701) target = $region64
      $region63: #{tpu_custom_call.1} parent=5 // pred_region
        %s704 = ssub.s32 %s19, 2
        // Predicated region
        $region65: #{tpu_custom_call.1} parent=63 // pred_check
          %p705 = pneg %p169
        $region66: #{tpu_custom_call.1} parent=63 // pred_check_branch
          %707 = sbr.rel (%p705) target = $region68
        $region67: #{tpu_custom_call.1} parent=63 // pred_region
          %s708 = sand.u32 %s154, 1
          %s709 = scalar_lea.sflag [#allocation5], %s708
          %s710 = sand.u32 %s154, 1
          %s711 = smul.addr %s710, 128
          %s712 = scalar_lea.vmem [#allocation9], %s711
          %714 = dma.done %s709, 2048
        $region68: #{tpu_custom_call.1} parent=63 // pred_fallthru
          _
      $region64: #{tpu_custom_call.1} parent=5 // pred_fallthru
        _
    $region6: #{tpu_custom_call.1} parent=1 // loop_footer
      %s23 = sadd.s32 1, %s19
    $region7: #{tpu_custom_call.1} parent=1 // loop_footer_branch
      %18 = sbr.rel target = $region3
    $region8: #{tpu_custom_call.1} parent=1 // loop_exit
      _
    %715 = vsyncpa [#allocation4], 1
    %s716 = scalar_lea.sflag [#allocation4], 1
    %717 = vsyncpa %s716, 1
    %718 = vsyncpa [#allocation7], 1
    %s719 = scalar_lea.sflag [#allocation7], 1
    %720 = vsyncpa %s719, 1
    %721 = vsyncpa [#allocation5], 1
    %s722 = scalar_lea.sflag [#allocation5], 1
    %723 = vsyncpa %s722, 1

</llo_original>
